<compile_context>
chip_gen: v6e
topology: v6e:2x2x1
jax: 0.10.0
libtpu: 0.0.40
codegen_flags: <defaults>
</compile_context>

<pallas_src>
import functools
import math

import jax
import jax.numpy as jnp
from jax.experimental import pallas as pl
from jax.experimental.pallas import tpu as pltpu

_MIB = 1024 * 1024
_MASK_VALUE = -1e30


def _round_up(n, m):
    return ((n + m - 1) // m) * m


def _pick_tile(n, target):
    """Largest multiple-of-8 divisor of n that is <= target.

    Falls back to the full dimension (always a legal Pallas block) when no
    such divisor exists, so it never degenerates to tiny tiles and always
    satisfies the (8, 128) block-shape constraint on the sublane dim.
    """
    if n <= target:
        return n
    best = 0
    for d in range(8, target + 1, 8):
        if n % d == 0:
            best = d
    return best if best >= 8 else n
    # TODO(synk): prime-ish n falls back to one full-size block; pad + mask
    # would be needed to tile those.


def _fit_tile(n, target, est_fn, budget):
    """Largest tile <= target whose per-step VMEM estimate fits the budget."""
    cand = _pick_tile(n, target)
    for t in (target, 512, 256, 128, 64, 32, 16, 8):
        if t > target:
            continue
        cand = _pick_tile(n, t)
        if est_fn(cand) <= budget:
            break
    return cand


def _vmem_limit(step_bytes):
    # At least the 16/32 MiB scoped defaults (helps v5e/v6e), capped well
    # below v7x's 64 MiB physical VMEM.
    return int(min(max(2 * step_bytes, 32 * _MIB), 40 * _MIB))


# ---------------------------------------------------------------------------
# Fused projection kernel: one concatenated-weight matmul per row tile, the
# result sliced per group / per head and stored head-major (B, H, L, e).
# ---------------------------------------------------------------------------
def _head_proj_kernel(x_ref, w_ref, b_ref, *o_refs, n_heads, head_dims,
                      compute_dtype):
    x = x_ref[0].astype(compute_dtype)                              # (tl, K)
    y = jnp.dot(x, w_ref[...], preferred_element_type=jnp.float32) + b_ref[...]
    off = 0
    for e, o_ref in zip(head_dims, o_refs):
        for h in range(n_heads):
            o_ref[0, h] = y[:, off + h * e: off + (h + 1) * e].astype(o_ref.dtype)
        off += n_heads * e


def head_projection(x, weights, biases, head_dims, out_dtypes, n_heads, *,
                    compute_dtype, row_tile=512):
    """y_g = x @ W_g + b_g per group, emitted head-major (B, H, L, e_g).

    All groups share one concatenated, VMEM-resident weight so each row tile
    costs a single MXU matmul and a single read of x, and the head split never
    round-trips through HBM.
    # TODO(synk): resident weights assume d_model * sum(widths) fits VMEM; a
    # very large d_model would need a K/N-tiled variant.
    """
    B, L, K = x.shape
    widths = [n_heads * e for e in head_dims]
    ntot = sum(widths)
    w_cat = jnp.concatenate([w.astype(compute_dtype) for w in weights], axis=1)
    b_cat = jnp.concatenate([b.astype(jnp.float32) for b in biases]).reshape(1, ntot)

    xb = jnp.dtype(x.dtype).itemsize
    wb = jnp.dtype(compute_dtype).itemsize

    def est(tl):
        in_b = 2 * tl * K * xb + 2 * K * ntot * wb + 2 * ntot * 4
        tmp_b = 2 * tl * ntot * 4
        out_b = 2 * sum(tl * w * jnp.dtype(dt).itemsize
                        for w, dt in zip(widths, out_dtypes))
        return in_b + tmp_b + out_b

    tl = _fit_tile(L, row_tile, est, 20 * _MIB)
    grid = (B, pl.cdiv(L, tl))

    in_specs = [
        pl.BlockSpec((1, tl, K), lambda b, i: (b, i, 0)),
        # Grid-invariant (VMEM-resident) weight and bias.
        # TODO(synk): pipeline_mode=pl.Buffered(1) would reclaim their second
        # buffer on v7x once that kwarg is universally available.
        pl.BlockSpec((K, ntot), lambda b, i: (0, 0)),
        pl.BlockSpec((1, ntot), lambda b, i: (0, 0)),
    ]
    out_specs = tuple(
        pl.BlockSpec((1, n_heads, tl, e), lambda b, i: (b, 0, i, 0))
        for e in head_dims)
    out_shape = tuple(
        jax.ShapeDtypeStruct((B, n_heads, L, e), dt)
        for e, dt in zip(head_dims, out_dtypes))

    kernel = functools.partial(_head_proj_kernel, n_heads=n_heads,
                               head_dims=tuple(head_dims),
                               compute_dtype=compute_dtype)
    return pl.pallas_call(
        kernel,
        out_shape=out_shape,
        grid=grid,
        in_specs=in_specs,
        out_specs=out_specs,
        compiler_params=pltpu.CompilerParams(
            dimension_semantics=("parallel", "parallel"),
            vmem_limit_bytes=_vmem_limit(est(tl))),
    )(x, w_cat, b_cat)


# ---------------------------------------------------------------------------
# Anomaly attention kernel: one (batch, head, L-tile) per grid step.
# ---------------------------------------------------------------------------
def _anomaly_attn_kernel(q_ref, k_ref, v_ref, sig_ref,
                         out_ref, series_ref, prior_ref, sigma_ref,
                         *, scale, valid_s, compute_dtype, approx_recip):
    tl = q_ref.shape[2]
    S = k_ref.shape[2]

    q = q_ref[0, 0]            # (tl, E) compute dtype
    k = k_ref[0, 0]            # (S,  E)
    v = v_ref[0, 0]            # (S,  D)

    ci = jax.lax.broadcasted_iota(jnp.int32, (tl, S), 1)

    # series = softmax(scale * q @ k^T) over the key axis (f32 accumulation).
    sc = jax.lax.dot_general(q, k, (((1,), (1,)), ((), ())),
                             preferred_element_type=jnp.float32) * scale
    if valid_s is not None and valid_s < S:
        sc = jnp.where(ci < valid_s, sc, _MASK_VALUE)      # padded key lanes
    m = jnp.max(sc, axis=-1, keepdims=True)
    e = jnp.exp(sc - m)
    inv_denom = pl.reciprocal(jnp.sum(e, axis=-1, keepdims=True),
                              approx=approx_recip)         # divide on (tl, 1)
    series = e * inv_denom
    series_ref[0, 0] = series.astype(series_ref.dtype)

    # sigma transform on the compact (tl, 1) column (no (tl, S) broadcast out).
    s = sig_ref[0, 0].astype(jnp.float32)
    s = jax.nn.sigmoid(s * 5.0) + 1e-5
    s = jnp.exp(s * math.log(3.0)) - 1.0                   # 3**s - 1
    sigma_ref[0, 0] = s

    # Gaussian prior over (i-j)^2; distances generated in-kernel, divisions
    # hoisted onto (tl, 1) reciprocals.
    ri = jax.lax.broadcasted_iota(jnp.int32, (tl, S), 0) + pl.program_id(2) * tl
    d = (ri - ci).astype(jnp.float32)
    inv_sig = pl.reciprocal(s, approx=approx_recip)        # (tl, 1)
    # TODO(synk): on v6e/v7x this exp could run in bf16 on the EUP (~2x); kept
    # f32 so the same code stays optimal on v5e (no bf16 EUP/VPU).
    prior = (inv_sig * (1.0 / math.sqrt(2.0 * math.pi))) * jnp.exp(
        -(d * d) * (0.5 * (inv_sig * inv_sig)))
    prior_ref[0, 0] = prior.astype(prior_ref.dtype)

    # V = series @ v (f32 accumulation on the MXU).
    out_ref[0, 0] = jnp.dot(series.astype(compute_dtype), v,
                            preferred_element_type=jnp.float32
                            ).astype(out_ref.dtype)


def anomaly_attention(q, k, v, sig, scale, *, compute_dtype, assoc_dtype,
                      valid_s=None, l_tile=256):
    """q,k,v: (B,H,L,E)/(B,H,S,E)/(B,H,S,D) head-major; sig: (B,H,L,1)."""
    B, H, L, E = q.shape
    S = k.shape[2]
    D = v.shape[3]
    cb = jnp.dtype(compute_dtype).itemsize
    ab = jnp.dtype(assoc_dtype).itemsize

    def est(tl):
        in_b = 2 * (tl * E * cb + S * E * cb + S * D * cb + tl * 4)
        out_b = 2 * (tl * D * cb + 2 * tl * S * ab + tl * 4)
        tmp_b = 8 * tl * S * 4   # sc/e/series/iota/dist/prior temporaries
        return in_b + out_b + tmp_b

    tl = _fit_tile(L, l_tile, est, 14 * _MIB)
    n_l = pl.cdiv(L, tl)

    approx_recip = jnp.dtype(compute_dtype) != jnp.dtype(jnp.float32)
    kernel = functools.partial(_anomaly_attn_kernel, scale=scale,
                               valid_s=valid_s, compute_dtype=compute_dtype,
                               approx_recip=approx_recip)
    out_shape = (
        jax.ShapeDtypeStruct((B, H, L, D), compute_dtype),   # V (head-major)
        jax.ShapeDtypeStruct((B, H, L, S), assoc_dtype),     # series
        jax.ShapeDtypeStruct((B, H, L, S), assoc_dtype),     # prior
        jax.ShapeDtypeStruct((B, H, L, 1), jnp.float32),     # sigma (compact)
    )
    return pl.pallas_call(
        kernel,
        out_shape=out_shape,
        grid=(B, H, n_l),
        in_specs=[
            pl.BlockSpec((1, 1, tl, E), lambda b, h, i: (b, h, i, 0)),
            pl.BlockSpec((1, 1, S, E), lambda b, h, i: (b, h, 0, 0)),   # reused over i
            pl.BlockSpec((1, 1, S, D), lambda b, h, i: (b, h, 0, 0)),   # reused over i
            pl.BlockSpec((1, 1, tl, 1), lambda b, h, i: (b, h, i, 0)),
        ],
        out_specs=(
            pl.BlockSpec((1, 1, tl, D), lambda b, h, i: (b, h, i, 0)),
            pl.BlockSpec((1, 1, tl, S), lambda b, h, i: (b, h, i, 0)),
            pl.BlockSpec((1, 1, tl, S), lambda b, h, i: (b, h, i, 0)),
            pl.BlockSpec((1, 1, tl, 1), lambda b, h, i: (b, h, i, 0)),
        ),
        compiler_params=pltpu.CompilerParams(
            dimension_semantics=("parallel", "parallel", "parallel"),
            vmem_limit_bytes=_vmem_limit(est(tl))),
    )(q, k, v, sig)


# ---------------------------------------------------------------------------
# Output projection: consumes the head-major attention output directly via
# per-head accumulated matmuls (no (B,H,L,D) -> (B,L,H*D) XLA transpose).
# ---------------------------------------------------------------------------
def _out_proj_kernel(xh_ref, w_ref, b_ref, o_ref, *, n_heads, compute_dtype):
    D = xh_ref.shape[3]
    acc = None
    for h in range(n_heads):
        xh = xh_ref[0, h].astype(compute_dtype)               # (tl, D)
        p = jnp.dot(xh, w_ref[h * D:(h + 1) * D, :],
                    preferred_element_type=jnp.float32)
        acc = p if acc is None else acc + p
    o_ref[0] = (acc + b_ref[...]).astype(o_ref.dtype)


def out_projection(xh, wo, bo, *, compute_dtype, out_dtype=jnp.float32,
                   row_tile=512):
    B, H, L, D = xh.shape
    d_model = wo.shape[1]
    cb = jnp.dtype(compute_dtype).itemsize

    def est(tl):
        in_b = 2 * tl * H * D * cb + 2 * H * D * d_model * cb + 2 * d_model * 4
        tmp_b = 2 * tl * d_model * 4
        out_b = 2 * tl * d_model * jnp.dtype(out_dtype).itemsize
        return in_b + tmp_b + out_b

    tl = _fit_tile(L, row_tile, est, 20 * _MIB)
    grid = (B, pl.cdiv(L, tl))

    kernel = functools.partial(_out_proj_kernel, n_heads=H,
                               compute_dtype=compute_dtype)
    return pl.pallas_call(
        kernel,
        out_shape=jax.ShapeDtypeStruct((B, L, d_model), out_dtype),
        grid=grid,
        in_specs=[
            pl.BlockSpec((1, H, tl, D), lambda b, i: (b, 0, i, 0)),
            pl.BlockSpec((H * D, d_model), lambda b, i: (0, 0)),   # resident
            pl.BlockSpec((1, d_model), lambda b, i: (0, 0)),       # resident
        ],
        out_specs=pl.BlockSpec((1, tl, d_model), lambda b, i: (b, i, 0)),
        compiler_params=pltpu.CompilerParams(
            dimension_semantics=("parallel", "parallel"),
            vmem_limit_bytes=_vmem_limit(est(tl))),
    )(xh, wo.astype(compute_dtype), bo.reshape(1, -1).astype(jnp.float32))


# ---------------------------------------------------------------------------
# Module wrapper (glue in plain JAX)
# ---------------------------------------------------------------------------
def init_params(key, d_model, num_heads, d_keys=None, d_values=None):
    d_keys = d_keys or d_model // num_heads
    d_values = d_values or d_model // num_heads
    ks = jax.random.split(key, 10)

    def w(k, shape):
        return jax.random.normal(k, shape, jnp.float32) * 0.05

    return {
        "wq": w(ks[0], (d_model, d_keys * num_heads)),
        "bq": w(ks[1], (d_keys * num_heads,)),
        "wk": w(ks[2], (d_model, d_keys * num_heads)),
        "bk": w(ks[3], (d_keys * num_heads,)),
        "wv": w(ks[4], (d_model, d_values * num_heads)),
        "bv": w(ks[5], (d_values * num_heads,)),
        "wsig": w(ks[6], (d_model, num_heads)),
        "bsig": w(ks[7], (num_heads,)),
        "wo": w(ks[8], (d_values * num_heads, d_model)),
        "bo": w(ks[9], (d_model,)),
    }


def attention_layer_forward(params, queries, keys, values, attn_mask, num_heads,
                            *, compute_dtype=jnp.bfloat16, assoc_dtype=None,
                            pad_keys_to=None, broadcast_sigma=False):
    """AttentionLayer(AnomalyAttention) forward on TPU Pallas kernels.

    assoc_dtype      storage dtype of series/prior (defaults to compute_dtype;
                     the downstream KL term accumulates in f32 anyway).
    pad_keys_to      optionally pad L/S up to this multiple (e.g. 128) for
                     lane-dense series/prior stores (in-kernel softmax mask);
                     outputs are sliced back, which costs an extra pass, so
                     only enable it if the consumer can take padded outputs.
    broadcast_sigma  if True, return sigma broadcast to (B,H,L,S) like the
                     PyTorch module; default False returns the compact
                     (B,H,L,1) column so the broadcast can fuse into the
                     association-discrepancy computation instead of being
                     materialised in HBM here.
    """
    del attn_mask  # mask_flag=False in orion's AnomalyTransformer
    if assoc_dtype is None:
        assoc_dtype = compute_dtype

    B, L, d_model = queries.shape
    S = keys.shape[1]
    H = num_heads
    E = params["wq"].shape[1] // H
    D = params["wv"].shape[1] // H

    if pad_keys_to:
        Lp, Sp = _round_up(L, pad_keys_to), _round_up(S, pad_keys_to)
    else:
        Lp, Sp = L, S

    def pad_seq(x, p):
        return x if x.shape[1] == p else jnp.pad(
            x, ((0, 0), (0, p - x.shape[1]), (0, 0)))

    # NOTE: identity check -- semantically identical but distinct arrays take
    # the (still correct, slightly slower) non-fused projection path.
    if (queries is keys) and (keys is values):
        xq = pad_seq(queries, Lp)
        qh, kh, vh, sigh = head_projection(
            xq,
            (params["wq"], params["wk"], params["wv"], params["wsig"]),
            (params["bq"], params["bk"], params["bv"], params["bsig"]),
            (E, E, D, 1),
            (compute_dtype, compute_dtype, compute_dtype, jnp.float32),
            H, compute_dtype=compute_dtype)
    else:
        qh, sigh = head_projection(
            pad_seq(queries, Lp),
            (params["wq"], params["wsig"]), (params["bq"], params["bsig"]),
            (E, 1), (compute_dtype, jnp.float32), H,
            compute_dtype=compute_dtype)
        kh, = head_projection(
            pad_seq(keys, Sp), (params["wk"],), (params["bk"],),
            (E,), (compute_dtype,), H, compute_dtype=compute_dtype)
        vh, = head_projection(
            pad_seq(values, Sp), (params["wv"],), (params["bv"],),
            (D,), (compute_dtype,), H, compute_dtype=compute_dtype)

    scale = 1.0 / math.sqrt(E)
    out_h, series, prior, sigma_c = anomaly_attention(
        qh, kh, vh, sigh, scale, compute_dtype=compute_dtype,
        assoc_dtype=assoc_dtype, valid_s=(S if Sp != S else None))

    out = out_projection(out_h, params["wo"], params["bo"],
                         compute_dtype=compute_dtype)

    if Lp != L or Sp != S:
        out = out[:, :L]
        series = series[:, :, :L, :S]
        prior = prior[:, :, :L, :S]
        sigma_c = sigma_c[:, :, :L]

    sigma = jnp.broadcast_to(sigma_c, (B, H, L, S)) if broadcast_sigma else sigma_c
    return out, series, prior, sigma


# ---------------------------------------------------------------------------
# Pure-JAX reference (mirrors the PyTorch forward)
# ---------------------------------------------------------------------------
def reference_forward(params, queries, keys, values, num_heads):
    B, L, d_model = queries.shape
    S = keys.shape[1]
    H = num_heads
    x = queries

    q = (queries @ params["wq"] + params["bq"]).reshape(B, L, H, -1)
    k = (keys @ params["wk"] + params["bk"]).reshape(B, S, H, -1)
    v = (values @ params["wv"] + params["bv"]).reshape(B, S, H, -1)
    sig = (x @ params["wsig"] + params["bsig"]).reshape(B, L, H)

    E = q.shape[-1]
    scale = 1.0 / math.sqrt(E)
    scores = jnp.einsum("blhe,bshe->bhls", q, k)
    attn = scale * scores

    sig = jnp.transpose(sig, (0, 2, 1))               # B H L
    sig = jax.nn.sigmoid(sig * 5.0) + 1e-5
    sig = jnp.power(3.0, sig) - 1.0
    sig = jnp.broadcast_to(sig[..., None], (B, H, L, S))

    ii = jnp.arange(L, dtype=jnp.float32)[:, None]
    jj = jnp.arange(S, dtype=jnp.float32)[None, :]
    dist = jnp.abs(ii - jj)
    prior = (1.0 / (math.sqrt(2.0 * math.pi) * sig)
             * jnp.exp(-dist[None, None] ** 2 / 2.0 / (sig ** 2)))

    series = jax.nn.softmax(attn, axis=-1)
    V = jnp.einsum("bhls,bshd->blhd", series, v)
    out = V.reshape(B, L, -1) @ params["wo"] + params["bo"]
    return out, series, prior, sig


# ---------------------------------------------------------------------------
if __name__ == "__main__":
    B, L, d_model, H = 2, 16, 32, 4

    key = jax.random.PRNGKey(0)
    kx, kp = jax.random.split(key)
    x = jax.random.normal(kx, (B, L, d_model), jnp.float32)
    params = init_params(kp, d_model, H)

    ref = reference_forward(params, x, x, x, H)

    def check(got, rtol, atol, name):
        out, series, prior, sigma_c = got
        sigma = jnp.broadcast_to(sigma_c, ref[3].shape)  # compact -> torch layout
        for g, w, nm in zip((out, series, prior, sigma), ref,
                            ("out", "series", "prior", "sigma")):
            assert g.shape == w.shape, (name, nm, g.shape, w.shape)
            assert jnp.allclose(g.astype(jnp.float32), w, rtol=rtol, atol=atol), \
                (name, nm, "mismatch")

    # Exact f32 path: must match the reference tightly.
    got = attention_layer_forward(params, x, x, x, None, H,
                                  compute_dtype=jnp.float32)
    jax.block_until_ready(got)
    check(got, 1e-4, 1e-4, "f32")

    # f32 path with key-lane padding (exercises the in-kernel softmax mask).
    got = attention_layer_forward(params, x, x, x, None, H,
                                  compute_dtype=jnp.float32, pad_keys_to=128)
    jax.block_until_ready(got)
    check(got, 1e-4, 1e-4, "f32-padded")

    # bf16 MXU-operand fast path (f32 accumulation, bf16 series/prior storage).
    got = attention_layer_forward(params, x, x, x, None, H,
                                  compute_dtype=jnp.bfloat16)
    jax.block_until_ready(got)
    check(got, 4e-2, 2e-2, "bf16")

    print("KERNEL_OK")
</pallas_src>

<mosaic_0001>
module attributes {stable_mosaic.version = 11 : i64} {
  func.func @_head_proj_kernel(%arg0: i32, %arg1: i32, %arg2: memref<1x16x32xf32, #tpu.memory_space<vmem>>, %arg3: memref<32x100xf32, #tpu.memory_space<vmem>>, %arg4: memref<1x100xf32, #tpu.memory_space<vmem>>, %arg5: memref<1x4x16x8xf32, #tpu.memory_space<vmem>>, %arg6: memref<1x4x16x8xf32, #tpu.memory_space<vmem>>, %arg7: memref<1x4x16x8xf32, #tpu.memory_space<vmem>>, %arg8: memref<1x4x16x1xf32, #tpu.memory_space<vmem>>) attributes {dimension_semantics = [#tpu.dimension_semantics<parallel>, #tpu.dimension_semantics<parallel>], iteration_bounds = array<i64: 2, 1>, scalar_prefetch = 0 : i64, scratch_operands = 0 : i64, tpu.core_type = #tpu.core_type<tc>, window_params = [{transform_indices = @transform_0, window_bounds = array<i64: 1, 16, 32>}, {pipeline_mode = #tpu.pipeline_mode<synchronous>, transform_indices = @transform_1, window_bounds = array<i64: 32, 100>}, {pipeline_mode = #tpu.pipeline_mode<synchronous>, transform_indices = @transform_2, window_bounds = array<i64: 1, 100>}, {transform_indices = @transform_3, window_bounds = array<i64: 1, 4, 16, 8>}, {transform_indices = @transform_4, window_bounds = array<i64: 1, 4, 16, 8>}, {transform_indices = @transform_5, window_bounds = array<i64: 1, 4, 16, 8>}, {transform_indices = @transform_6, window_bounds = array<i64: 1, 4, 16, 1>}]} {
    %c0 = arith.constant 0 : index
    %c0_0 = arith.constant 0 : index
    %c0_1 = arith.constant 0 : index
    %0 = vector.load %arg2[%c0, %c0_0, %c0_1] : memref<1x16x32xf32, #tpu.memory_space<vmem>>, vector<1x16x32xf32>
    %1 = vector.shape_cast %0 : vector<1x16x32xf32> to vector<16x32xf32>
    %c0_2 = arith.constant 0 : index
    %c0_3 = arith.constant 0 : index
    %2 = vector.load %arg3[%c0_2, %c0_3] : memref<32x100xf32, #tpu.memory_space<vmem>>, vector<32x100xf32>
    %cst = arith.constant dense<0.000000e+00> : vector<16x100xf32>
    %3 = tpu.matmul %1, %2, %cst {dimension_numbers = #tpu.dot_dimension_numbers<[1], [0], [0], [1], [0, 0, 1, 1], [], []>} : vector<16x32xf32>, vector<32x100xf32>, vector<16x100xf32> -> vector<16x100xf32>
    %c0_4 = arith.constant 0 : index
    %c0_5 = arith.constant 0 : index
    %4 = vector.load %arg4[%c0_4, %c0_5] : memref<1x100xf32, #tpu.memory_space<vmem>>, vector<1x100xf32>
    %5 = vector.broadcast %4 : vector<1x100xf32> to vector<16x100xf32>
    %6 = arith.addf %3, %5 : vector<16x100xf32>
    %7 = vector.extract_strided_slice %6 {offsets = [0, 0], sizes = [16, 8], strides = [1, 1]} : vector<16x100xf32> to vector<16x8xf32>
    %c0_6 = arith.constant 0 : index
    %c0_7 = arith.constant 0 : index
    %c0_8 = arith.constant 0 : index
    %c0_9 = arith.constant 0 : index
    %8 = vector.load %arg5[%c0_6, %c0_7, %c0_8, %c0_9] : memref<1x4x16x8xf32, #tpu.memory_space<vmem>>, vector<1x1x16x8xf32>
    %9 = vector.shape_cast %8 : vector<1x1x16x8xf32> to vector<16x8xf32>
    %10 = vector.shape_cast %7 : vector<16x8xf32> to vector<1x1x16x8xf32>
    tpu.vector_store %arg5[%c0_6, %c0_7, %c0_8, %c0_9], %10 {strides = array<i32>} : memref<1x4x16x8xf32, #tpu.memory_space<vmem>>, vector<1x1x16x8xf32>,
    %11 = vector.extract_strided_slice %6 {offsets = [0, 8], sizes = [16, 8], strides = [1, 1]} : vector<16x100xf32> to vector<16x8xf32>
    %c0_10 = arith.constant 0 : index
    %c1 = arith.constant 1 : index
    %c0_11 = arith.constant 0 : index
    %c0_12 = arith.constant 0 : index
    %12 = vector.load %arg5[%c0_10, %c1, %c0_11, %c0_12] : memref<1x4x16x8xf32, #tpu.memory_space<vmem>>, vector<1x1x16x8xf32>
    %13 = vector.shape_cast %12 : vector<1x1x16x8xf32> to vector<16x8xf32>
    %14 = vector.shape_cast %11 : vector<16x8xf32> to vector<1x1x16x8xf32>
    tpu.vector_store %arg5[%c0_10, %c1, %c0_11, %c0_12], %14 {strides = array<i32>} : memref<1x4x16x8xf32, #tpu.memory_space<vmem>>, vector<1x1x16x8xf32>,
    %15 = vector.extract_strided_slice %6 {offsets = [0, 16], sizes = [16, 8], strides = [1, 1]} : vector<16x100xf32> to vector<16x8xf32>
    %c0_13 = arith.constant 0 : index
    %c2 = arith.constant 2 : index
    %c0_14 = arith.constant 0 : index
    %c0_15 = arith.constant 0 : index
    %16 = vector.load %arg5[%c0_13, %c2, %c0_14, %c0_15] : memref<1x4x16x8xf32, #tpu.memory_space<vmem>>, vector<1x1x16x8xf32>
    %17 = vector.shape_cast %16 : vector<1x1x16x8xf32> to vector<16x8xf32>
    %18 = vector.shape_cast %15 : vector<16x8xf32> to vector<1x1x16x8xf32>
    tpu.vector_store %arg5[%c0_13, %c2, %c0_14, %c0_15], %18 {strides = array<i32>} : memref<1x4x16x8xf32, #tpu.memory_space<vmem>>, vector<1x1x16x8xf32>,
    %19 = vector.extract_strided_slice %6 {offsets = [0, 24], sizes = [16, 8], strides = [1, 1]} : vector<16x100xf32> to vector<16x8xf32>
    %c0_16 = arith.constant 0 : index
    %c3 = arith.constant 3 : index
    %c0_17 = arith.constant 0 : index
    %c0_18 = arith.constant 0 : index
    %20 = vector.load %arg5[%c0_16, %c3, %c0_17, %c0_18] : memref<1x4x16x8xf32, #tpu.memory_space<vmem>>, vector<1x1x16x8xf32>
    %21 = vector.shape_cast %20 : vector<1x1x16x8xf32> to vector<16x8xf32>
    %22 = vector.shape_cast %19 : vector<16x8xf32> to vector<1x1x16x8xf32>
    tpu.vector_store %arg5[%c0_16, %c3, %c0_17, %c0_18], %22 {strides = array<i32>} : memref<1x4x16x8xf32, #tpu.memory_space<vmem>>, vector<1x1x16x8xf32>,
    %23 = vector.extract_strided_slice %6 {offsets = [0, 32], sizes = [16, 8], strides = [1, 1]} : vector<16x100xf32> to vector<16x8xf32>
    %c0_19 = arith.constant 0 : index
    %c0_20 = arith.constant 0 : index
    %c0_21 = arith.constant 0 : index
    %c0_22 = arith.constant 0 : index
    %24 = vector.load %arg6[%c0_19, %c0_20, %c0_21, %c0_22] : memref<1x4x16x8xf32, #tpu.memory_space<vmem>>, vector<1x1x16x8xf32>
    %25 = vector.shape_cast %24 : vector<1x1x16x8xf32> to vector<16x8xf32>
    %26 = vector.shape_cast %23 : vector<16x8xf32> to vector<1x1x16x8xf32>
    tpu.vector_store %arg6[%c0_19, %c0_20, %c0_21, %c0_22], %26 {strides = array<i32>} : memref<1x4x16x8xf32, #tpu.memory_space<vmem>>, vector<1x1x16x8xf32>,
    %27 = vector.extract_strided_slice %6 {offsets = [0, 40], sizes = [16, 8], strides = [1, 1]} : vector<16x100xf32> to vector<16x8xf32>
    %c0_23 = arith.constant 0 : index
    %c1_24 = arith.constant 1 : index
    %c0_25 = arith.constant 0 : index
    %c0_26 = arith.constant 0 : index
    %28 = vector.load %arg6[%c0_23, %c1_24, %c0_25, %c0_26] : memref<1x4x16x8xf32, #tpu.memory_space<vmem>>, vector<1x1x16x8xf32>
    %29 = vector.shape_cast %28 : vector<1x1x16x8xf32> to vector<16x8xf32>
    %30 = vector.shape_cast %27 : vector<16x8xf32> to vector<1x1x16x8xf32>
    tpu.vector_store %arg6[%c0_23, %c1_24, %c0_25, %c0_26], %30 {strides = array<i32>} : memref<1x4x16x8xf32, #tpu.memory_space<vmem>>, vector<1x1x16x8xf32>,
    %31 = vector.extract_strided_slice %6 {offsets = [0, 48], sizes = [16, 8], strides = [1, 1]} : vector<16x100xf32> to vector<16x8xf32>
    %c0_27 = arith.constant 0 : index
    %c2_28 = arith.constant 2 : index
    %c0_29 = arith.constant 0 : index
    %c0_30 = arith.constant 0 : index
    %32 = vector.load %arg6[%c0_27, %c2_28, %c0_29, %c0_30] : memref<1x4x16x8xf32, #tpu.memory_space<vmem>>, vector<1x1x16x8xf32>
    %33 = vector.shape_cast %32 : vector<1x1x16x8xf32> to vector<16x8xf32>
    %34 = vector.shape_cast %31 : vector<16x8xf32> to vector<1x1x16x8xf32>
    tpu.vector_store %arg6[%c0_27, %c2_28, %c0_29, %c0_30], %34 {strides = array<i32>} : memref<1x4x16x8xf32, #tpu.memory_space<vmem>>, vector<1x1x16x8xf32>,
    %35 = vector.extract_strided_slice %6 {offsets = [0, 56], sizes = [16, 8], strides = [1, 1]} : vector<16x100xf32> to vector<16x8xf32>
    %c0_31 = arith.constant 0 : index
    %c3_32 = arith.constant 3 : index
    %c0_33 = arith.constant 0 : index
    %c0_34 = arith.constant 0 : index
    %36 = vector.load %arg6[%c0_31, %c3_32, %c0_33, %c0_34] : memref<1x4x16x8xf32, #tpu.memory_space<vmem>>, vector<1x1x16x8xf32>
    %37 = vector.shape_cast %36 : vector<1x1x16x8xf32> to vector<16x8xf32>
    %38 = vector.shape_cast %35 : vector<16x8xf32> to vector<1x1x16x8xf32>
    tpu.vector_store %arg6[%c0_31, %c3_32, %c0_33, %c0_34], %38 {strides = array<i32>} : memref<1x4x16x8xf32, #tpu.memory_space<vmem>>, vector<1x1x16x8xf32>,
    %39 = vector.extract_strided_slice %6 {offsets = [0, 64], sizes = [16, 8], strides = [1, 1]} : vector<16x100xf32> to vector<16x8xf32>
    %c0_35 = arith.constant 0 : index
    %c0_36 = arith.constant 0 : index
    %c0_37 = arith.constant 0 : index
    %c0_38 = arith.constant 0 : index
    %40 = vector.load %arg7[%c0_35, %c0_36, %c0_37, %c0_38] : memref<1x4x16x8xf32, #tpu.memory_space<vmem>>, vector<1x1x16x8xf32>
    %41 = vector.shape_cast %40 : vector<1x1x16x8xf32> to vector<16x8xf32>
    %42 = vector.shape_cast %39 : vector<16x8xf32> to vector<1x1x16x8xf32>
    tpu.vector_store %arg7[%c0_35, %c0_36, %c0_37, %c0_38], %42 {strides = array<i32>} : memref<1x4x16x8xf32, #tpu.memory_space<vmem>>, vector<1x1x16x8xf32>,
    %43 = vector.extract_strided_slice %6 {offsets = [0, 72], sizes = [16, 8], strides = [1, 1]} : vector<16x100xf32> to vector<16x8xf32>
    %c0_39 = arith.constant 0 : index
    %c1_40 = arith.constant 1 : index
    %c0_41 = arith.constant 0 : index
    %c0_42 = arith.constant 0 : index
    %44 = vector.load %arg7[%c0_39, %c1_40, %c0_41, %c0_42] : memref<1x4x16x8xf32, #tpu.memory_space<vmem>>, vector<1x1x16x8xf32>
    %45 = vector.shape_cast %44 : vector<1x1x16x8xf32> to vector<16x8xf32>
    %46 = vector.shape_cast %43 : vector<16x8xf32> to vector<1x1x16x8xf32>
    tpu.vector_store %arg7[%c0_39, %c1_40, %c0_41, %c0_42], %46 {strides = array<i32>} : memref<1x4x16x8xf32, #tpu.memory_space<vmem>>, vector<1x1x16x8xf32>,
    %47 = vector.extract_strided_slice %6 {offsets = [0, 80], sizes = [16, 8], strides = [1, 1]} : vector<16x100xf32> to vector<16x8xf32>
    %c0_43 = arith.constant 0 : index
    %c2_44 = arith.constant 2 : index
    %c0_45 = arith.constant 0 : index
    %c0_46 = arith.constant 0 : index
    %48 = vector.load %arg7[%c0_43, %c2_44, %c0_45, %c0_46] : memref<1x4x16x8xf32, #tpu.memory_space<vmem>>, vector<1x1x16x8xf32>
    %49 = vector.shape_cast %48 : vector<1x1x16x8xf32> to vector<16x8xf32>
    %50 = vector.shape_cast %47 : vector<16x8xf32> to vector<1x1x16x8xf32>
    tpu.vector_store %arg7[%c0_43, %c2_44, %c0_45, %c0_46], %50 {strides = array<i32>} : memref<1x4x16x8xf32, #tpu.memory_space<vmem>>, vector<1x1x16x8xf32>,
    %51 = vector.extract_strided_slice %6 {offsets = [0, 88], sizes = [16, 8], strides = [1, 1]} : vector<16x100xf32> to vector<16x8xf32>
    %c0_47 = arith.constant 0 : index
    %c3_48 = arith.constant 3 : index
    %c0_49 = arith.constant 0 : index
    %c0_50 = arith.constant 0 : index
    %52 = vector.load %arg7[%c0_47, %c3_48, %c0_49, %c0_50] : memref<1x4x16x8xf32, #tpu.memory_space<vmem>>, vector<1x1x16x8xf32>
    %53 = vector.shape_cast %52 : vector<1x1x16x8xf32> to vector<16x8xf32>
    %54 = vector.shape_cast %51 : vector<16x8xf32> to vector<1x1x16x8xf32>
    tpu.vector_store %arg7[%c0_47, %c3_48, %c0_49, %c0_50], %54 {strides = array<i32>} : memref<1x4x16x8xf32, #tpu.memory_space<vmem>>, vector<1x1x16x8xf32>,
    %55 = vector.extract_strided_slice %6 {offsets = [0, 96], sizes = [16, 1], strides = [1, 1]} : vector<16x100xf32> to vector<16x1xf32>
    %c0_51 = arith.constant 0 : index
    %c0_52 = arith.constant 0 : index
    %c0_53 = arith.constant 0 : index
    %c0_54 = arith.constant 0 : index
    %56 = vector.load %arg8[%c0_51, %c0_52, %c0_53, %c0_54] : memref<1x4x16x1xf32, #tpu.memory_space<vmem>>, vector<1x1x16x1xf32>
    %57 = vector.shape_cast %56 : vector<1x1x16x1xf32> to vector<16x1xf32>
    %58 = vector.shape_cast %55 : vector<16x1xf32> to vector<1x1x16x1xf32>
    tpu.vector_store %arg8[%c0_51, %c0_52, %c0_53, %c0_54], %58 {strides = array<i32>} : memref<1x4x16x1xf32, #tpu.memory_space<vmem>>, vector<1x1x16x1xf32>,
    %59 = vector.extract_strided_slice %6 {offsets = [0, 97], sizes = [16, 1], strides = [1, 1]} : vector<16x100xf32> to vector<16x1xf32>
    %c0_55 = arith.constant 0 : index
    %c1_56 = arith.constant 1 : index
    %c0_57 = arith.constant 0 : index
    %c0_58 = arith.constant 0 : index
    %60 = vector.load %arg8[%c0_55, %c1_56, %c0_57, %c0_58] : memref<1x4x16x1xf32, #tpu.memory_space<vmem>>, vector<1x1x16x1xf32>
    %61 = vector.shape_cast %60 : vector<1x1x16x1xf32> to vector<16x1xf32>
    %62 = vector.shape_cast %59 : vector<16x1xf32> to vector<1x1x16x1xf32>
    tpu.vector_store %arg8[%c0_55, %c1_56, %c0_57, %c0_58], %62 {strides = array<i32>} : memref<1x4x16x1xf32, #tpu.memory_space<vmem>>, vector<1x1x16x1xf32>,
    %63 = vector.extract_strided_slice %6 {offsets = [0, 98], sizes = [16, 1], strides = [1, 1]} : vector<16x100xf32> to vector<16x1xf32>
    %c0_59 = arith.constant 0 : index
    %c2_60 = arith.constant 2 : index
    %c0_61 = arith.constant 0 : index
    %c0_62 = arith.constant 0 : index
    %64 = vector.load %arg8[%c0_59, %c2_60, %c0_61, %c0_62] : memref<1x4x16x1xf32, #tpu.memory_space<vmem>>, vector<1x1x16x1xf32>
    %65 = vector.shape_cast %64 : vector<1x1x16x1xf32> to vector<16x1xf32>
    %66 = vector.shape_cast %63 : vector<16x1xf32> to vector<1x1x16x1xf32>
    tpu.vector_store %arg8[%c0_59, %c2_60, %c0_61, %c0_62], %66 {strides = array<i32>} : memref<1x4x16x1xf32, #tpu.memory_space<vmem>>, vector<1x1x16x1xf32>,
    %67 = vector.extract_strided_slice %6 {offsets = [0, 99], sizes = [16, 1], strides = [1, 1]} : vector<16x100xf32> to vector<16x1xf32>
    %c0_63 = arith.constant 0 : index
    %c3_64 = arith.constant 3 : index
    %c0_65 = arith.constant 0 : index
    %c0_66 = arith.constant 0 : index
    %68 = vector.load %arg8[%c0_63, %c3_64, %c0_65, %c0_66] : memref<1x4x16x1xf32, #tpu.memory_space<vmem>>, vector<1x1x16x1xf32>
    %69 = vector.shape_cast %68 : vector<1x1x16x1xf32> to vector<16x1xf32>
    %70 = vector.shape_cast %67 : vector<16x1xf32> to vector<1x1x16x1xf32>
    tpu.vector_store %arg8[%c0_63, %c3_64, %c0_65, %c0_66], %70 {strides = array<i32>} : memref<1x4x16x1xf32, #tpu.memory_space<vmem>>, vector<1x1x16x1xf32>,
    return
  }
  func.func @transform_0(%arg0: i32, %arg1: i32) -> (i32, i32, i32) {
    %c0_i32 = arith.constant 0 : i32
    %c0_i32_0 = arith.constant 0 : i32
    return %arg0, %arg1, %c0_i32 : i32, i32, i32
  }
  func.func @transform_1(%arg0: i32, %arg1: i32) -> (i32, i32) {
    %c0_i32 = arith.constant 0 : i32
    %c0_i32_0 = arith.constant 0 : i32
    %c0_i32_1 = arith.constant 0 : i32
    return %c0_i32, %c0_i32_0 : i32, i32
  }
  func.func @transform_2(%arg0: i32, %arg1: i32) -> (i32, i32) {
    %c0_i32 = arith.constant 0 : i32
    %c0_i32_0 = arith.constant 0 : i32
    %c0_i32_1 = arith.constant 0 : i32
    return %c0_i32, %c0_i32_0 : i32, i32
  }
  func.func @transform_3(%arg0: i32, %arg1: i32) -> (i32, i32, i32, i32) {
    %c0_i32 = arith.constant 0 : i32
    %c0_i32_0 = arith.constant 0 : i32
    %c0_i32_1 = arith.constant 0 : i32
    return %arg0, %c0_i32, %arg1, %c0_i32_0 : i32, i32, i32, i32
  }
  func.func @transform_4(%arg0: i32, %arg1: i32) -> (i32, i32, i32, i32) {
    %c0_i32 = arith.constant 0 : i32
    %c0_i32_0 = arith.constant 0 : i32
    %c0_i32_1 = arith.constant 0 : i32
    return %arg0, %c0_i32, %arg1, %c0_i32_0 : i32, i32, i32, i32
  }
  func.func @transform_5(%arg0: i32, %arg1: i32) -> (i32, i32, i32, i32) {
    %c0_i32 = arith.constant 0 : i32
    %c0_i32_0 = arith.constant 0 : i32
    %c0_i32_1 = arith.constant 0 : i32
    return %arg0, %c0_i32, %arg1, %c0_i32_0 : i32, i32, i32, i32
  }
  func.func @transform_6(%arg0: i32, %arg1: i32) -> (i32, i32, i32, i32) {
    %c0_i32 = arith.constant 0 : i32
    %c0_i32_0 = arith.constant 0 : i32
    %c0_i32_1 = arith.constant 0 : i32
    return %arg0, %c0_i32, %arg1, %c0_i32_0 : i32, i32, i32, i32
  }
}

</mosaic_0001>

<llo_original>
// kernel: tpu_custom_call.1
$region0: #{tpu_custom_call.1}
  #allocation0 [shape = 'u32[]', space=smem, size = 0x4, offset = 0x4, fixed_abs, tag = 'smem constant byte address 0x4 - core index']
  #allocation1 [shape = 'u32[144,128]{1,0:T(1,128)}', space=vmem, size = 0x12000, scoped, tag = 'internal scratch']
  %s0 = inlined_call_operand.hbm [shape: f32[2,16,32], index: 0, kind: input, shape index: {}]
  %s1 = inlined_call_operand.hbm [shape: f32[32,100], index: 1, kind: input, shape index: {}]
  %s2 = inlined_call_operand.vmem [shape: f32[1,100], index: 2, kind: input, shape index: {}]
  %s3 = inlined_call_operand.vmem [shape: f32[2,4,16,8], index: 3, kind: output, shape index: {0}]
  %s4 = inlined_call_operand.vmem [shape: f32[2,4,16,8], index: 4, kind: output, shape index: {1}]
  %s5 = inlined_call_operand.vmem [shape: f32[2,4,16,8], index: 5, kind: output, shape index: {2}]
  %s6 = inlined_call_operand.vmem [shape: f32[2,4,16,1], index: 6, kind: output, shape index: {3}]
  %7 = xla_tuple %s3, %s4, %s5, %s6
  %s8 = sld [smem:[#allocation0]]
  $region77: #{tpu_custom_call.1} parent=0
    _
  %s10 = ssub.s32 1, %s8
  %s11 = scalar_select 0, %s10, %s8
  $region1: #{tpu_custom_call.1} parent=0
    #allocation2 [shape = 'u8[16384]{0}', space=vmem, size = 0x4000, scoped, tag = 'input window, operand 0']
    #allocation3 [shape = 's32[2]{0}', space=sflag, size = 0x8, scoped, tag = 'scoped memory for tpu_custom_call.1']
    #allocation4 [shape = 'u8[16384]{0}', space=vmem, size = 0x4000, scoped, tag = 'input window, operand 1, single buffered']
    #allocation5 [shape = 's32[1]{0}', space=sflag, size = 0x4, scoped, tag = 'scoped memory for tpu_custom_call.1']
    %12 = vsyncpa [#allocation3], 0
    %s13 = scalar_lea.sflag [#allocation3], 1
    %14 = vsyncpa %s13, 0
    %15 = vsyncpa [#allocation5], 0
    loop: start=0, step=1, limit=4
    $region2: #{tpu_custom_call.1} parent=1 // loop_pre_header
      _
    $region3: #{tpu_custom_call.1} parent=1 // loop_header
      %s17 = sphi 0, %s21
      %p18 = scmp.ge.s32.totalorder %s17, 4
      %s24 = sphi 0, %s36
      %s25 = sphi 0, %s32
      %s26 = sphi 0, %s24
      %s27 = sphi 0, %s25
      %s28 = sphi 0, %s26
      %s29 = sphi 0, %s27
      %s41 = sphi 0, %s43
      %s44 = sphi 0, %s41
      %s45 = sphi 0, %s44
      %s61 = sphi 0, %s45
      %s65 = sphi 0, %s65
      %s67 = sphi 0, %s65
      %s68 = sphi 0, %s67
      %s82 = sphi 0, %s68
      %s86 = sphi 0, %s86
      %s88 = sphi 0, %s86
      %s89 = sphi 0, %s88
      %s103 = sphi 0, %s89
      %s111 = sphi 0, %s113
      %s114 = sphi 0, %s111
      %s115 = sphi 0, %s114
      %s131 = sphi 0, %s115
      %s139 = sphi 0, %s141
      %s142 = sphi 0, %s139
      %s143 = sphi 0, %s142
      %s159 = sphi 0, %s143
      %s167 = sphi 0, %s169
      %s170 = sphi 0, %s167
      %s171 = sphi 0, %s170
      %s187 = sphi 0, %s171
      %s195 = sphi 0, %s197
      %s198 = sphi 0, %s195
      %s199 = sphi 0, %s198
      %s215 = sphi 0, %s199
    $region4: #{tpu_custom_call.1} parent=1 // loop_header_branch
      %20 = sbr.rel (%p18) target = $region8
    $region5: #{tpu_custom_call.1} parent=1 // loop_body
      %s22 = ssub.s32 %s17, 1
      %s23 = ssub.s32 %s17, 2
      %s30 = sadd.s32 1, %s25
      %p31 = scmp.ge.s32.totalorder %s30, 1
      %s32 = scalar_select %p31, 0, %s30
      %s33 = sadd.s32 1, %s24
      %s34 = scalar_select %p31, %s33, %s24
      %p35 = scmp.ge.s32.totalorder %s34, 2
      %s36 = scalar_select %p35, 0, %s34
      %s37 = ssub.s32 %s24, %s36
      %s38 = ssub.s32 %s25, %s32
      %s39 = sor.u32 %s37, %s38
      %p40 = scmp.eq.s32.totalorder %s39, 0
      %s42 = sadd.s32 %s41, 1
      %s43 = scalar_select %p40, %s41, %s42
      %p46 = pneg %p40
      %p47 = scmp.eq.s32.totalorder %s17, 1
      %p48 = por %p46, %p47
      %p49 = scmp.ne.s32.totalorder %s41, %s44
      %p50 = scmp.eq.s32.totalorder %s17, 0
      %p51 = por %p49, %p50
      %p52 = scmp.ne.s32.totalorder %s41, %s44
      %p53 = scmp.eq.s32.totalorder %s22, 1
      %p54 = por %p52, %p53
      %p55 = scmp.ne.s32.totalorder %s44, %s45
      %p56 = scmp.eq.s32.totalorder %s22, 0
      %p57 = por %p55, %p56
      %p58 = scmp.ne.s32.totalorder %s44, %s45
      %p59 = scmp.eq.s32.totalorder %s23, 1
      %p60 = por %p58, %p59
      %p62 = scmp.ne.s32.totalorder %s45, %s61
      %p63 = scmp.eq.s32.totalorder %s23, 0
      %p64 = por %p62, %p63
      %s66 = sadd.s32 %s65, 1
      %p69 = scmp.eq.s32.totalorder %s17, 1
      %p70 = scmp.ne.s32.totalorder %s65, %s67
      %p71 = scmp.eq.s32.totalorder %s17, 0
      %p72 = por %p70, %p71
      %p73 = scmp.ne.s32.totalorder %s65, %s67
      %p74 = scmp.eq.s32.totalorder %s22, 1
      %p75 = por %p73, %p74
      %p76 = scmp.ne.s32.totalorder %s67, %s68
      %p77 = scmp.eq.s32.totalorder %s22, 0
      %p78 = por %p76, %p77
      %p79 = scmp.ne.s32.totalorder %s67, %s68
      %p80 = scmp.eq.s32.totalorder %s23, 1
      %p81 = por %p79, %p80
      %p83 = scmp.ne.s32.totalorder %s68, %s82
      %p84 = scmp.eq.s32.totalorder %s23, 0
      %p85 = por %p83, %p84
      %s87 = sadd.s32 %s86, 1
      %p90 = scmp.eq.s32.totalorder %s17, 1
      %p91 = scmp.ne.s32.totalorder %s86, %s88
      %p92 = scmp.eq.s32.totalorder %s17, 0
      %p93 = por %p91, %p92
      %p94 = scmp.ne.s32.totalorder %s86, %s88
      %p95 = scmp.eq.s32.totalorder %s22, 1
      %p96 = por %p94, %p95
      %p97 = scmp.ne.s32.totalorder %s88, %s89
      %p98 = scmp.eq.s32.totalorder %s22, 0
      %p99 = por %p97, %p98
      %p100 = scmp.ne.s32.totalorder %s88, %s89
      %p101 = scmp.eq.s32.totalorder %s23, 1
      %p102 = por %p100, %p101
      %p104 = scmp.ne.s32.totalorder %s89, %s103
      %p105 = scmp.eq.s32.totalorder %s23, 0
      %p106 = por %p104, %p105
      %s107 = ssub.s32 %s24, %s36
      %s108 = ssub.s32 %s25, %s32
      %s109 = sor.u32 %s107, %s108
      %p110 = scmp.eq.s32.totalorder %s109, 0
      %s112 = sadd.s32 %s111, 1
      %s113 = scalar_select %p110, %s111, %s112
      %p116 = pneg %p110
      %p117 = scmp.eq.s32.totalorder %s17, 1
      %p118 = por %p116, %p117
      %p119 = scmp.ne.s32.totalorder %s111, %s114
      %p120 = scmp.eq.s32.totalorder %s17, 0
      %p121 = por %p119, %p120
      %p122 = scmp.ne.s32.totalorder %s111, %s114
      %p123 = scmp.eq.s32.totalorder %s22, 1
      %p124 = por %p122, %p123
      %p125 = scmp.ne.s32.totalorder %s114, %s115
      %p126 = scmp.eq.s32.totalorder %s22, 0
      %p127 = por %p125, %p126
      %p128 = scmp.ne.s32.totalorder %s114, %s115
      %p129 = scmp.eq.s32.totalorder %s23, 1
      %p130 = por %p128, %p129
      %p132 = scmp.ne.s32.totalorder %s115, %s131
      %p133 = scmp.eq.s32.totalorder %s23, 0
      %p134 = por %p132, %p133
      %s135 = ssub.s32 %s24, %s36
      %s136 = ssub.s32 %s25, %s32
      %s137 = sor.u32 %s135, %s136
      %p138 = scmp.eq.s32.totalorder %s137, 0
      %s140 = sadd.s32 %s139, 1
      %s141 = scalar_select %p138, %s139, %s140
      %p144 = pneg %p138
      %p145 = scmp.eq.s32.totalorder %s17, 1
      %p146 = por %p144, %p145
      %p147 = scmp.ne.s32.totalorder %s139, %s142
      %p148 = scmp.eq.s32.totalorder %s17, 0
      %p149 = por %p147, %p148
      %p150 = scmp.ne.s32.totalorder %s139, %s142
      %p151 = scmp.eq.s32.totalorder %s22, 1
      %p152 = por %p150, %p151
      %p153 = scmp.ne.s32.totalorder %s142, %s143
      %p154 = scmp.eq.s32.totalorder %s22, 0
      %p155 = por %p153, %p154
      %p156 = scmp.ne.s32.totalorder %s142, %s143
      %p157 = scmp.eq.s32.totalorder %s23, 1
      %p158 = por %p156, %p157
      %p160 = scmp.ne.s32.totalorder %s143, %s159
      %p161 = scmp.eq.s32.totalorder %s23, 0
      %p162 = por %p160, %p161
      %s163 = ssub.s32 %s24, %s36
      %s164 = ssub.s32 %s25, %s32
      %s165 = sor.u32 %s163, %s164
      %p166 = scmp.eq.s32.totalorder %s165, 0
      %s168 = sadd.s32 %s167, 1
      %s169 = scalar_select %p166, %s167, %s168
      %p172 = pneg %p166
      %p173 = scmp.eq.s32.totalorder %s17, 1
      %p174 = por %p172, %p173
      %p175 = scmp.ne.s32.totalorder %s167, %s170
      %p176 = scmp.eq.s32.totalorder %s17, 0
      %p177 = por %p175, %p176
      %p178 = scmp.ne.s32.totalorder %s167, %s170
      %p179 = scmp.eq.s32.totalorder %s22, 1
      %p180 = por %p178, %p179
      %p181 = scmp.ne.s32.totalorder %s170, %s171
      %p182 = scmp.eq.s32.totalorder %s22, 0
      %p183 = por %p181, %p182
      %p184 = scmp.ne.s32.totalorder %s170, %s171
      %p185 = scmp.eq.s32.totalorder %s23, 1
      %p186 = por %p184, %p185
      %p188 = scmp.ne.s32.totalorder %s171, %s187
      %p189 = scmp.eq.s32.totalorder %s23, 0
      %p190 = por %p188, %p189
      %s191 = ssub.s32 %s24, %s36
      %s192 = ssub.s32 %s25, %s32
      %s193 = sor.u32 %s191, %s192
      %p194 = scmp.eq.s32.totalorder %s193, 0
      %s196 = sadd.s32 %s195, 1
      %s197 = scalar_select %p194, %s195, %s196
      %p200 = pneg %p194
      %p201 = scmp.eq.s32.totalorder %s17, 1
      %p202 = por %p200, %p201
      %p203 = scmp.ne.s32.totalorder %s195, %s198
      %p204 = scmp.eq.s32.totalorder %s17, 0
      %p205 = por %p203, %p204
      %p206 = scmp.ne.s32.totalorder %s195, %s198
      %p207 = scmp.eq.s32.totalorder %s22, 1
      %p208 = por %p206, %p207
      %p209 = scmp.ne.s32.totalorder %s198, %s199
      %p210 = scmp.eq.s32.totalorder %s22, 0
      %p211 = por %p209, %p210
      %p212 = scmp.ne.s32.totalorder %s198, %s199
      %p213 = scmp.eq.s32.totalorder %s23, 1
      %p214 = por %p212, %p213
      %p216 = scmp.ne.s32.totalorder %s199, %s215
      %p217 = scmp.eq.s32.totalorder %s23, 0
      %p218 = por %p216, %p217
      %p219 = scmp.le.s32.totalorder 1, %s17
      %p220 = scmp.lt.s32.totalorder %s17, 3
      %p221 = pnand %p219, %p220
      %p222 = pneg %p221
      // Predicated region
      $region9: #{tpu_custom_call.1} parent=5 // pred_check
        _
      $region10: #{tpu_custom_call.1} parent=5 // pred_check_branch
        %224 = sbr.rel (%p221) target = $region12
      $region11: #{tpu_custom_call.1} parent=5 // pred_region
        %s225 = ssub.s32 %s17, 1
        // Predicated region
        $region13: #{tpu_custom_call.1} parent=11 // pred_check
          %p226 = pneg %p78
        $region14: #{tpu_custom_call.1} parent=11 // pred_check_branch
          %228 = sbr.rel (%p226) target = $region16
        $region15: #{tpu_custom_call.1} parent=11 // pred_region
          %s230 = ssub.s32 512, 512
          %231 = vsyncadd [#allocation5], %s230
          %s232 = sshll.u32 [#allocation4], 4
          %s233 = int_to_ptr.vmem [resolvable:$true] %s232
          %238 = dma.hbm_to_vmem [thread:$0]  %s1, 512, %s233, [#allocation5], 128, 128, 8
        $region16: #{tpu_custom_call.1} parent=11 // pred_fallthru
          _
        // Predicated region
        $region17: #{tpu_custom_call.1} parent=11 // pred_check
          %p239 = pneg %p99
        $region18: #{tpu_custom_call.1} parent=11 // pred_check_branch
          %241 = sbr.rel (%p239) target = $region20
        $region19: #{tpu_custom_call.1} parent=11 // pred_region
          _
        $region20: #{tpu_custom_call.1} parent=11 // pred_fallthru
          _
      $region12: #{tpu_custom_call.1} parent=5 // pred_fallthru
        _
      %p242 = scmp.lt.s32.totalorder %s17, 2
      // Predicated region
      $region21: #{tpu_custom_call.1} parent=5 // pred_check
        %p243 = pneg %p242
      $region22: #{tpu_custom_call.1} parent=5 // pred_check_branch
        %245 = sbr.rel (%p243) target = $region24
      $region23: #{tpu_custom_call.1} parent=5 // pred_region
        // Predicated region
        $region25: #{tpu_custom_call.1} parent=23 // pred_check
          %p246 = pneg %p51
        $region26: #{tpu_custom_call.1} parent=23 // pred_check_branch
          %248 = sbr.rel (%p246) target = $region28
        $region27: #{tpu_custom_call.1} parent=23 // pred_region
          %s249 = sand.u32 %s41, 1
          %s250 = scalar_lea.sflag [#allocation3], %s249
          %s251 = sand.u32 %s41, 1
          %s252 = smul.addr %s251, 16
          %s253 = scalar_lea.vmem [#allocation2], %s252
          %s254 = smul.u32 2, %s25
          %s256 = ssub.s32 256, 256
          %257 = vsyncadd %s250, %s256
          %s258 = smul.addr %s24, 2
          %s259 = sadd.s32 %s254, %s258
          %s260 = smul.addr %s259, 128
          %s261 = scalar_lea.hbm %s0, %s260
          %s262 = sshll.u32 %s253, 4
          %s263 = int_to_ptr.vmem [resolvable:$true] %s262
          %268 = dma.hbm_to_vmem [thread:$0]  %s261, 256, %s263, %s250, 128, 128, 8
        $region28: #{tpu_custom_call.1} parent=23 // pred_fallthru
          _
      $region24: #{tpu_custom_call.1} parent=5 // pred_fallthru
        _
      %p269 = scmp.le.s32.totalorder 1, %s17
      %p270 = scmp.lt.s32.totalorder %s17, 3
      %p271 = pnand %p269, %p270
      %p272 = pneg %p271
      // Predicated region
      $region29: #{tpu_custom_call.1} parent=5 // pred_check
        _
      $region30: #{tpu_custom_call.1} parent=5 // pred_check_branch
        %274 = sbr.rel (%p271) target = $region32
      $region31: #{tpu_custom_call.1} parent=5 // pred_region
        %s275 = ssub.s32 %s17, 1
        %s276 = sand.u32 %s44, 1
        %s277 = scalar_lea.sflag [#allocation3], %s276
        %s278 = sand.u32 %s44, 1
        %s279 = smul.addr %s278, 16
        %s280 = scalar_lea.vmem [#allocation2], %s279
        // Predicated region
        $region33: #{tpu_custom_call.1} parent=31 // pred_check
          %p281 = pneg %p57
        $region34: #{tpu_custom_call.1} parent=31 // pred_check_branch
          %283 = sbr.rel (%p281) target = $region36
        $region35: #{tpu_custom_call.1} parent=31 // pred_region
          %284 = dma.done %s277, 256
        $region36: #{tpu_custom_call.1} parent=31 // pred_fallthru
          _
        // Predicated region
        $region37: #{tpu_custom_call.1} parent=31 // pred_check
          %p285 = pneg %p78
        $region38: #{tpu_custom_call.1} parent=31 // pred_check_branch
          %287 = sbr.rel (%p285) target = $region40
        $region39: #{tpu_custom_call.1} parent=31 // pred_region
          %288 = dma.done [#allocation5], 512
        $region40: #{tpu_custom_call.1} parent=31 // pred_fallthru
          _
        %s289 = sand.u32 %s44, 1
        %s290 = scalar_lea.sflag [#allocation3], %s289
        %s291 = sand.u32 %s44, 1
        %s292 = smul.addr %s291, 16
        %s293 = scalar_lea.vmem [#allocation2], %s292
        %p294 = pneg %p57
        %p295 = pneg %p54
        %p296 = pneg %p78
        %p297 = pneg %p75
        %p298 = pneg %p99
        %p299 = pneg %p96
        %p300 = pneg %p127
        %p301 = pneg %p124
        %s302 = smul.u32 2, %s27
        %p303 = scmp.lt.s32.totalorder %s26, 1
        %s304 = scalar_select %p303, %s26, 1
        %p305 = scmp.lt.s32.totalorder %s302, 1
        %s306 = scalar_select %p305, %s302, 1
        %s307 = smul.addr %s304, 8
        %s308 = sadd.s32 %s306, %s307
        %s309 = smul.addr %s308, 8
        %s310 = scalar_lea.vmem %s3, %s309
        %p311 = pneg %p155
        %p312 = pneg %p152
        %s313 = smul.u32 2, %s27
        %p314 = scmp.lt.s32.totalorder %s26, 1
        %s315 = scalar_select %p314, %s26, 1
        %p316 = scmp.lt.s32.totalorder %s313, 1
        %s317 = scalar_select %p316, %s313, 1
        %s318 = smul.addr %s315, 8
        %s319 = sadd.s32 %s317, %s318
        %s320 = smul.addr %s319, 8
        %s321 = scalar_lea.vmem %s4, %s320
        %p322 = pneg %p183
        %p323 = pneg %p180
        %s324 = smul.u32 2, %s27
        %p325 = scmp.lt.s32.totalorder %s26, 1
        %s326 = scalar_select %p325, %s26, 1
        %p327 = scmp.lt.s32.totalorder %s324, 1
        %s328 = scalar_select %p327, %s324, 1
        %s329 = smul.addr %s326, 8
        %s330 = sadd.s32 %s328, %s329
        %s331 = smul.addr %s330, 8
        %s332 = scalar_lea.vmem %s5, %s331
        %p333 = pneg %p211
        %p334 = pneg %p208
        %s335 = smul.u32 2, %s27
        %p336 = scmp.lt.s32.totalorder %s26, 1
        %s337 = scalar_select %p336, %s26, 1
        %p338 = scmp.lt.s32.totalorder %s335, 1
        %s339 = scalar_select %p338, %s335, 1
        %s340 = smul.addr %s337, 8
        %s341 = sadd.s32 %s339, %s340
        %s342 = smul.addr %s341, 8
        %s343 = scalar_lea.vmem %s6, %s342
        %s344 = smul.u32 2, %s27
        %s345 = smul.u32 2, %s27
        %p346 = scmp.lt.s32.totalorder %s26, 1
        %s347 = scalar_select %p346, %s26, 1
        %p348 = scmp.lt.s32.totalorder %s345, 1
        %s349 = scalar_select %p348, %s345, 1
        %s350 = smul.addr %s347, 8
        %s351 = sadd.s32 %s349, %s350
        %s352 = smul.addr %s351, 8
        %s353 = scalar_lea.vmem %s3, %s352
        %s354 = smul.u32 2, %s27
        %s355 = smul.u32 2, %s27
        %p356 = scmp.lt.s32.totalorder %s26, 1
        %s357 = scalar_select %p356, %s26, 1
        %p358 = scmp.lt.s32.totalorder %s355, 1
        %s359 = scalar_select %p358, %s355, 1
        %s360 = smul.addr %s357, 8
        %s361 = sadd.s32 %s359, %s360
        %s362 = smul.addr %s361, 8
        %s363 = scalar_lea.vmem %s4, %s362
        %s364 = smul.u32 2, %s27
        %s365 = smul.u32 2, %s27
        %p366 = scmp.lt.s32.totalorder %s26, 1
        %s367 = scalar_select %p366, %s26, 1
        %p368 = scmp.lt.s32.totalorder %s365, 1
        %s369 = scalar_select %p368, %s365, 1
        %s370 = smul.addr %s367, 8
        %s371 = sadd.s32 %s369, %s370
        %s372 = smul.addr %s371, 8
        %s373 = scalar_lea.vmem %s5, %s372
        %s374 = smul.u32 2, %s27
        %s375 = smul.u32 2, %s27
        %p376 = scmp.lt.s32.totalorder %s26, 1
        %s377 = scalar_select %p376, %s26, 1
        %p378 = scmp.lt.s32.totalorder %s375, 1
        %s379 = scalar_select %p378, %s375, 1
        %s380 = smul.addr %s377, 8
        %s381 = sadd.s32 %s379, %s380
        %s382 = smul.addr %s381, 8
        %s383 = scalar_lea.vmem %s6, %s382
        %s384 = smul.u32 2, %s27
        %v385 = vld [vmem:[%s280] sm:$0xff]
        %v386 = vld [vmem:[%s280 + $0x8] sm:$0xff]
        %v387 = vld [vmem:[#allocation4] sm:$0xff]
        %v388 = vld [vmem:[#allocation4 + $0x8] sm:$0xff]
        %v389 = vld [vmem:[#allocation4 + $0x10] sm:$0xff]
        %v390 = vld [vmem:[#allocation4 + $0x18] sm:$0xff]
        %v391 = vld [vmem:[%s2] sm:$0x1]
        %v393 = vlaneseq
        %v394 = vshrl.u32 %v393, 7
        %v395 = vsub.s32 0, %v394
        %v396 = vrot.slane %v391, %v395
        %vm398 = vcmask 261120
        %v400 = vsel %vm398, %v385, 0
        %v403 = vsel %vm398, %v386, 0
        %405 = vmatprep.subr.mxu0 0.0
        %406 = vmatpush1.msra.mxu0 0.0
        %407 = vmatprep.subr.mxu0 0.0
        %408 = vmatpush1.msra.mxu0 0.0
        %409 = vmatprep.subr.mxu0 0.0
        %410 = vmatpush1.msra.mxu0 0.0
        %411 = vmatprep.subr.mxu0 0.0
        %412 = vmatpush1.msra.mxu0 0.0
        %413 = vmatprep.subr.mxu0 0.0
        %414 = vmatpush1.msra.mxu0 0.0
        %415 = vmatprep.subr.mxu0 0.0
        %416 = vmatpush1.msra.mxu0 0.0
        %417 = vmatprep.subr.mxu0 0.0
        %418 = vmatpush1.msra.mxu0 0.0
        %419 = vmatprep.subr.mxu0 0.0
        %420 = vmatpush1.msra.mxu0 0.0
        %421 = vmatprep.subr.mxu0 0.0
        %422 = vmatpush1.msra.mxu0 0.0
        %423 = vmatprep.subr.mxu0 0.0
        %424 = vmatpush1.msra.mxu0 0.0
        %425 = vmatprep.subr.mxu0 0.0
        %426 = vmatpush1.msra.mxu0 0.0
        %427 = vmatprep.subr.mxu0 0.0
        %428 = vmatpush1.msra.mxu0 0.0
        %429 = vmatprep.subr.mxu0 0.0
        %430 = vmatpush1.msra.mxu0 %v390
        %431 = vmatprep.subr.mxu0 0.0
        %432 = vmatpush1.msra.mxu0 %v389
        %433 = vmatprep.subr.mxu0 0.0
        %434 = vmatpush1.msra.mxu0 %v388
        %435 = vmatprep.subr.mxu0 0.0
        %436 = vmatpush1.msra.mxu0 %v387
        %437 = vmatprep.subr.mxu0 0.0
        %438 = vmatpush2.msra.mxu0 0.0
        %439 = vmatprep.subr.mxu0 0.0
        %440 = vmatpush2.msra.mxu0 0.0
        %441 = vmatprep.subr.mxu0 0.0
        %442 = vmatpush2.msra.mxu0 0.0
        %443 = vmatprep.subr.mxu0 0.0
        %444 = vmatpush2.msra.mxu0 0.0
        %445 = vmatprep.subr.mxu0 0.0
        %446 = vmatpush2.msra.mxu0 0.0
        %447 = vmatprep.subr.mxu0 0.0
        %448 = vmatpush2.msra.mxu0 0.0
        %449 = vmatprep.subr.mxu0 0.0
        %450 = vmatpush2.msra.mxu0 0.0
        %451 = vmatprep.subr.mxu0 0.0
        %452 = vmatpush2.msra.mxu0 0.0
        %453 = vmatprep.subr.mxu0 0.0
        %454 = vmatpush2.msra.mxu0 0.0
        %455 = vmatprep.subr.mxu0 0.0
        %456 = vmatpush2.msra.mxu0 0.0
        %457 = vmatprep.subr.mxu0 0.0
        %458 = vmatpush2.msra.mxu0 0.0
        %459 = vmatprep.subr.mxu0 0.0
        %460 = vmatpush2.msra.mxu0 0.0
        %461 = vmatprep.subr.mxu0 0.0
        %462 = vmatpush2.msra.mxu0 0.0
        %463 = vmatprep.subr.mxu0 0.0
        %464 = vmatpush2.msra.mxu0 0.0
        %465 = vmatprep.subr.mxu0 0.0
        %466 = vmatpush2.msra.mxu0 0.0
        %467 = vmatprep.subr.mxu0 0.0
        %468 = vmatpush2.msra.mxu0 0.0
        %469 = vmatprep.mubr.f32.mxu0 0.0
        %470 = vmatmul.mubr.f32.gmra.mxu0 %v400
        %v471 = vpop.f32.mrf.mxu0
        %v472 = vadd.f32 %v396, %v471
        %v473 = vpop.f32.mrf.mxu0
        %474 = vmatprep.mubr.f32.mxu0 0.0
        %475 = vmatmul.mubr.f32.gmra.mxu0 %v403
        %v476 = vpop.f32.mrf.mxu0
        %v477 = vadd.f32 %v396, %v476
        %v478 = vpop.f32.mrf.mxu0
        %479 = vdwg.mxu0
        %vm480 = vcmask 64512
        %481 = vst.msk [vmem:[%s353] sm:$0xff] %vm480, %v472
        %482 = vst.msk [vmem:[%s353 + $0x8] sm:$0xff] %vm480, %v477
        %485 = vrot.lane.b32.xlu0 %v472, 120
        %v486 = vpop.permute.xlu0 %485
        %487 = vrot.lane.b32.xlu0 %v477, 120
        %v488 = vpop.permute.xlu0 %487
        %s491 = scalar_lea.vmem %s353, 16
        %492 = vst.msk [vmem:[%s491] sm:$0xff] %vm480, %v486
        %493 = vst.msk [vmem:[%s491 + $0x8] sm:$0xff] %vm480, %v488
        %494 = vrot.lane.b32.xlu0 %v472, 112
        %v495 = vpop.permute.xlu0 %494
        %496 = vrot.lane.b32.xlu0 %v477, 112
        %v497 = vpop.permute.xlu0 %496
        %s500 = scalar_lea.vmem %s353, 32
        %501 = vst.msk [vmem:[%s500] sm:$0xff] %vm480, %v495
        %502 = vst.msk [vmem:[%s500 + $0x8] sm:$0xff] %vm480, %v497
        %503 = vrot.lane.b32.xlu0 %v472, 104
        %v504 = vpop.permute.xlu0 %503
        %505 = vrot.lane.b32.xlu0 %v477, 104
        %v506 = vpop.permute.xlu0 %505
        %s509 = scalar_lea.vmem %s353, 48
        %510 = vst.msk [vmem:[%s509] sm:$0xff] %vm480, %v504
        %511 = vst.msk [vmem:[%s509 + $0x8] sm:$0xff] %vm480, %v506
        %512 = vrot.lane.b32.xlu0 %v472, 96
        %v513 = vpop.permute.xlu0 %512
        %514 = vrot.lane.b32.xlu0 %v477, 96
        %v515 = vpop.permute.xlu0 %514
        %518 = vst.msk [vmem:[%s363] sm:$0xff] %vm480, %v513
        %519 = vst.msk [vmem:[%s363 + $0x8] sm:$0xff] %vm480, %v515
        %520 = vrot.lane.b32.xlu0 %v472, 88
        %v521 = vpop.permute.xlu0 %520
        %522 = vrot.lane.b32.xlu0 %v477, 88
        %v523 = vpop.permute.xlu0 %522
        %s526 = scalar_lea.vmem %s363, 16
        %527 = vst.msk [vmem:[%s526] sm:$0xff] %vm480, %v521
        %528 = vst.msk [vmem:[%s526 + $0x8] sm:$0xff] %vm480, %v523
        %529 = vrot.lane.b32.xlu0 %v472, 80
        %v530 = vpop.permute.xlu0 %529
        %531 = vrot.lane.b32.xlu0 %v477, 80
        %v532 = vpop.permute.xlu0 %531
        %s535 = scalar_lea.vmem %s363, 32
        %536 = vst.msk [vmem:[%s535] sm:$0xff] %vm480, %v530
        %537 = vst.msk [vmem:[%s535 + $0x8] sm:$0xff] %vm480, %v532
        %538 = vrot.lane.b32.xlu0 %v472, 72
        %v539 = vpop.permute.xlu0 %538
        %540 = vrot.lane.b32.xlu0 %v477, 72
        %v541 = vpop.permute.xlu0 %540
        %s544 = scalar_lea.vmem %s363, 48
        %545 = vst.msk [vmem:[%s544] sm:$0xff] %vm480, %v539
        %546 = vst.msk [vmem:[%s544 + $0x8] sm:$0xff] %vm480, %v541
        %547 = vrot.lane.b32.xlu0 %v472, 64
        %v548 = vpop.permute.xlu0 %547
        %549 = vrot.lane.b32.xlu0 %v477, 64
        %v550 = vpop.permute.xlu0 %549
        %553 = vst.msk [vmem:[%s373] sm:$0xff] %vm480, %v548
        %554 = vst.msk [vmem:[%s373 + $0x8] sm:$0xff] %vm480, %v550
        %555 = vrot.lane.b32.xlu0 %v472, 56
        %v556 = vpop.permute.xlu0 %555
        %557 = vrot.lane.b32.xlu0 %v477, 56
        %v558 = vpop.permute.xlu0 %557
        %s561 = scalar_lea.vmem %s373, 16
        %562 = vst.msk [vmem:[%s561] sm:$0xff] %vm480, %v556
        %563 = vst.msk [vmem:[%s561 + $0x8] sm:$0xff] %vm480, %v558
        %564 = vrot.lane.b32.xlu0 %v472, 48
        %v565 = vpop.permute.xlu0 %564
        %566 = vrot.lane.b32.xlu0 %v477, 48
        %v567 = vpop.permute.xlu0 %566
        %s570 = scalar_lea.vmem %s373, 32
        %571 = vst.msk [vmem:[%s570] sm:$0xff] %vm480, %v565
        %572 = vst.msk [vmem:[%s570 + $0x8] sm:$0xff] %vm480, %v567
        %573 = vrot.lane.b32.xlu0 %v472, 40
        %v574 = vpop.permute.xlu0 %573
        %575 = vrot.lane.b32.xlu0 %v477, 40
        %v576 = vpop.permute.xlu0 %575
        %s579 = scalar_lea.vmem %s373, 48
        %580 = vst.msk [vmem:[%s579] sm:$0xff] %vm480, %v574
        %581 = vst.msk [vmem:[%s579 + $0x8] sm:$0xff] %vm480, %v576
        %582 = vrot.lane.b32.xlu0 %v472, 32
        %v583 = vpop.permute.xlu0 %582
        %584 = vrot.lane.b32.xlu0 %v477, 32
        %v585 = vpop.permute.xlu0 %584
        %vm588 = vcmask 7168
        %589 = vst.msk [vmem:[%s383] sm:$0xff] %vm588, %v583
        %590 = vst.msk [vmem:[%s383 + $0x8] sm:$0xff] %vm588, %v585
        %591 = vrot.lane.b32.xlu0 %v472, 31
        %v592 = vpop.permute.xlu0 %591
        %593 = vrot.lane.b32.xlu0 %v477, 31
        %v594 = vpop.permute.xlu0 %593
        %s597 = scalar_lea.vmem %s383, 16
        %598 = vst.msk [vmem:[%s597] sm:$0xff] %vm588, %v592
        %599 = vst.msk [vmem:[%s597 + $0x8] sm:$0xff] %vm588, %v594
        %600 = vrot.lane.b32.xlu0 %v472, 30
        %v601 = vpop.permute.xlu0 %600
        %602 = vrot.lane.b32.xlu0 %v477, 30
        %v603 = vpop.permute.xlu0 %602
        %s606 = scalar_lea.vmem %s383, 32
        %607 = vst.msk [vmem:[%s606] sm:$0xff] %vm588, %v601
        %608 = vst.msk [vmem:[%s606 + $0x8] sm:$0xff] %vm588, %v603
        %609 = vrot.lane.b32.xlu0 %v472, 29
        %v610 = vpop.permute.xlu0 %609
        %611 = vrot.lane.b32.xlu0 %v477, 29
        %v612 = vpop.permute.xlu0 %611
        %s615 = scalar_lea.vmem %s383, 48
        %616 = vst.msk [vmem:[%s615] sm:$0xff] %vm588, %v610
        %617 = vst.msk [vmem:[%s615 + $0x8] sm:$0xff] %vm588, %v612
        %s618 = smul.u32 2, %s27
        %p619 = scmp.lt.s32.totalorder %s26, 1
        %s620 = scalar_select %p619, %s26, 1
        %p621 = scmp.lt.s32.totalorder %s618, 1
        %s622 = scalar_select %p621, %s618, 1
        %s623 = smul.addr %s620, 8
        %s624 = sadd.s32 %s622, %s623
        %s625 = smul.addr %s624, 8
        %s626 = scalar_lea.vmem %s3, %s625
        %s627 = smul.u32 2, %s27
        %p628 = scmp.lt.s32.totalorder %s26, 1
        %s629 = scalar_select %p628, %s26, 1
        %p630 = scmp.lt.s32.totalorder %s627, 1
        %s631 = scalar_select %p630, %s627, 1
        %s632 = smul.addr %s629, 8
        %s633 = sadd.s32 %s631, %s632
        %s634 = smul.addr %s633, 8
        %s635 = scalar_lea.vmem %s4, %s634
        %s636 = smul.u32 2, %s27
        %p637 = scmp.lt.s32.totalorder %s26, 1
        %s638 = scalar_select %p637, %s26, 1
        %p639 = scmp.lt.s32.totalorder %s636, 1
        %s640 = scalar_select %p639, %s636, 1
        %s641 = smul.addr %s638, 8
        %s642 = sadd.s32 %s640, %s641
        %s643 = smul.addr %s642, 8
        %s644 = scalar_lea.vmem %s5, %s643
        %s645 = smul.u32 2, %s27
        %p646 = scmp.lt.s32.totalorder %s26, 1
        %s647 = scalar_select %p646, %s26, 1
        %p648 = scmp.lt.s32.totalorder %s645, 1
        %s649 = scalar_select %p648, %s645, 1
        %s650 = smul.addr %s647, 8
        %s651 = sadd.s32 %s649, %s650
        %s652 = smul.addr %s651, 8
        %s653 = scalar_lea.vmem %s6, %s652
        // Predicated region
        $region41: #{tpu_custom_call.1} parent=31 // pred_check
          %p654 = pneg %p124
        $region42: #{tpu_custom_call.1} parent=31 // pred_check_branch
          %656 = sbr.rel (%p654) target = $region44
        $region43: #{tpu_custom_call.1} parent=31 // pred_region
          %s657 = smul.u32 2, %s27
        $region44: #{tpu_custom_call.1} parent=31 // pred_fallthru
          _
        // Predicated region
        $region45: #{tpu_custom_call.1} parent=31 // pred_check
          %p658 = pneg %p152
        $region46: #{tpu_custom_call.1} parent=31 // pred_check_branch
          %660 = sbr.rel (%p658) target = $region48
        $region47: #{tpu_custom_call.1} parent=31 // pred_region
          %s661 = smul.u32 2, %s27
        $region48: #{tpu_custom_call.1} parent=31 // pred_fallthru
          _
        // Predicated region
        $region49: #{tpu_custom_call.1} parent=31 // pred_check
          %p662 = pneg %p180
        $region50: #{tpu_custom_call.1} parent=31 // pred_check_branch
          %664 = sbr.rel (%p662) target = $region52
        $region51: #{tpu_custom_call.1} parent=31 // pred_region
          %s665 = smul.u32 2, %s27
        $region52: #{tpu_custom_call.1} parent=31 // pred_fallthru
          _
        // Predicated region
        $region53: #{tpu_custom_call.1} parent=31 // pred_check
          %p666 = pneg %p208
        $region54: #{tpu_custom_call.1} parent=31 // pred_check_branch
          %668 = sbr.rel (%p666) target = $region56
        $region55: #{tpu_custom_call.1} parent=31 // pred_region
          %s669 = smul.u32 2, %s27
        $region56: #{tpu_custom_call.1} parent=31 // pred_fallthru
          _
      $region32: #{tpu_custom_call.1} parent=5 // pred_fallthru
        _
      %p670 = scmp.le.s32.totalorder 2, %s17
      // Predicated region
      $region57: #{tpu_custom_call.1} parent=5 // pred_check
        %p671 = pneg %p670
      $region58: #{tpu_custom_call.1} parent=5 // pred_check_branch
        %673 = sbr.rel (%p671) target = $region60
      $region59: #{tpu_custom_call.1} parent=5 // pred_region
        %s674 = ssub.s32 %s17, 2
        // Predicated region
        $region61: #{tpu_custom_call.1} parent=59 // pred_check
          %p675 = pneg %p130
        $region62: #{tpu_custom_call.1} parent=59 // pred_check_branch
          %677 = sbr.rel (%p675) target = $region64
        $region63: #{tpu_custom_call.1} parent=59 // pred_region
          %s678 = smul.u32 2, %s29
          %p679 = scmp.lt.s32.totalorder %s28, 1
          %s680 = scalar_select %p679, %s28, 1
          %p681 = scmp.lt.s32.totalorder %s678, 1
          %s682 = scalar_select %p681, %s678, 1
          %s683 = smul.addr %s680, 8
          %s684 = sadd.s32 %s682, %s683
          %s685 = smul.addr %s684, 8
          %s686 = scalar_lea.vmem %s3, %s685
        $region64: #{tpu_custom_call.1} parent=59 // pred_fallthru
          _
        // Predicated region
        $region65: #{tpu_custom_call.1} parent=59 // pred_check
          %p687 = pneg %p158
        $region66: #{tpu_custom_call.1} parent=59 // pred_check_branch
          %689 = sbr.rel (%p687) target = $region68
        $region67: #{tpu_custom_call.1} parent=59 // pred_region
          %s690 = smul.u32 2, %s29
          %p691 = scmp.lt.s32.totalorder %s28, 1
          %s692 = scalar_select %p691, %s28, 1
          %p693 = scmp.lt.s32.totalorder %s690, 1
          %s694 = scalar_select %p693, %s690, 1
          %s695 = smul.addr %s692, 8
          %s696 = sadd.s32 %s694, %s695
          %s697 = smul.addr %s696, 8
          %s698 = scalar_lea.vmem %s4, %s697
        $region68: #{tpu_custom_call.1} parent=59 // pred_fallthru
          _
        // Predicated region
        $region69: #{tpu_custom_call.1} parent=59 // pred_check
          %p699 = pneg %p186
        $region70: #{tpu_custom_call.1} parent=59 // pred_check_branch
          %701 = sbr.rel (%p699) target = $region72
        $region71: #{tpu_custom_call.1} parent=59 // pred_region
          %s702 = smul.u32 2, %s29
          %p703 = scmp.lt.s32.totalorder %s28, 1
          %s704 = scalar_select %p703, %s28, 1
          %p705 = scmp.lt.s32.totalorder %s702, 1
          %s706 = scalar_select %p705, %s702, 1
          %s707 = smul.addr %s704, 8
          %s708 = sadd.s32 %s706, %s707
          %s709 = smul.addr %s708, 8
          %s710 = scalar_lea.vmem %s5, %s709
        $region72: #{tpu_custom_call.1} parent=59 // pred_fallthru
          _
        // Predicated region
        $region73: #{tpu_custom_call.1} parent=59 // pred_check
          %p711 = pneg %p214
        $region74: #{tpu_custom_call.1} parent=59 // pred_check_branch
          %713 = sbr.rel (%p711) target = $region76
        $region75: #{tpu_custom_call.1} parent=59 // pred_region
          %s714 = smul.u32 2, %s29
          %p715 = scmp.lt.s32.totalorder %s28, 1
          %s716 = scalar_select %p715, %s28, 1
          %p717 = scmp.lt.s32.totalorder %s714, 1
          %s718 = scalar_select %p717, %s714, 1
          %s719 = smul.addr %s716, 8
          %s720 = sadd.s32 %s718, %s719
          %s721 = smul.addr %s720, 8
          %s722 = scalar_lea.vmem %s6, %s721
        $region76: #{tpu_custom_call.1} parent=59 // pred_fallthru
          _
      $region60: #{tpu_custom_call.1} parent=5 // pred_fallthru
        _
    $region6: #{tpu_custom_call.1} parent=1 // loop_footer
      %s21 = sadd.s32 1, %s17
    $region7: #{tpu_custom_call.1} parent=1 // loop_footer_branch
      %16 = sbr.rel target = $region3
    $region8: #{tpu_custom_call.1} parent=1 // loop_exit
      _
    %723 = vsyncpa [#allocation3], 1
    %s724 = scalar_lea.sflag [#allocation3], 1
    %725 = vsyncpa %s724, 1
    %726 = vsyncpa [#allocation5], 1

</llo_original>
